<compile_context>
chip_gen: v7x
topology: tpu7x:2x2x1
jax: 0.10.0
libtpu: 0.0.40
codegen_flags: <defaults>
</compile_context>

<pallas_src>
import functools

import jax
import jax.numpy as jnp
from jax.experimental import pallas as pl
from jax.experimental.pallas import tpu as pltpu


_LANE = 128
_ROW_ALIGN = 16  # sublane alignment safe for both f32 (8) and bf16 (16) tiles


def _round_up(x: int, m: int) -> int:
    return (x + m - 1) // m * m


# ---------------------------------------------------------------------------
# Pallas kernel: fused MLP forward over one batch tile.
#   h = relu(x @ W0 + b0); ...; out = h @ WL + bL
# Matmul operands are bf16, accumulation is f32.
# ---------------------------------------------------------------------------
def _make_mlp_kernel(n_linear: int):
    def kernel(x_ref, *refs):
        out_ref = refs[-1]
        params = refs[:-1]

        h = x_ref[...]                              # (TB, K) bf16
        for i in range(n_linear):
            w = params[2 * i][...]                  # bf16
            b = params[2 * i + 1][...]              # f32
            h = jnp.dot(h, w, preferred_element_type=jnp.float32) + b
            if i < n_linear - 1:
                h = jnp.maximum(h, 0.0).astype(jnp.bfloat16)   # nonlin='relu'

        out_ref[...] = h.astype(out_ref.dtype)

    return kernel


# ---------------------------------------------------------------------------
# Parameter prep: zero-pad hidden dims to 128 lanes (exact: ReLU(0)=0 and zero
# rows/cols contribute nothing), keep the final layer narrow, cast weights to
# bf16.  Biases are normalized to (1, fan_out) and kept f32.
# ---------------------------------------------------------------------------
def _pad_and_cast_params(weights, biases):
    n = len(weights)
    prepared = []
    row_pad = 0
    for i, (w, b) in enumerate(zip(weights, biases)):
        w = jnp.asarray(w, jnp.float32)
        b = jnp.asarray(b, jnp.float32).reshape(1, -1)      # accept 1-D biases
        fan_out = w.shape[1]
        if row_pad:                                         # match prev layer's padded cols
            w = jnp.pad(w, ((0, row_pad), (0, 0)))
        col_pad = 0 if i == n - 1 else _round_up(fan_out, _LANE) - fan_out
        if col_pad:
            w = jnp.pad(w, ((0, 0), (0, col_pad)))
            b = jnp.pad(b, ((0, 0), (0, col_pad)))
        prepared.append(w.astype(jnp.bfloat16))
        prepared.append(b)                                   # f32
        row_pad = col_pad
    return prepared


# ---------------------------------------------------------------------------
# pallas_call wrapper: batch-only grid, VMEM-resident params, narrow output.
# ---------------------------------------------------------------------------
def _fused_mlp_forward(x, prepared_params, *, tb=2048):
    n_linear = len(prepared_params) // 2
    B, n_in = x.shape
    n_out = prepared_params[-1].shape[1]

    # Batch tiling: sublane-aligned rows, balanced tiles (no ragged final step),
    # and >= 2 grid steps for large batches so the "parallel" axis can shard
    # across the two TensorCores of a v7x chip.
    B_pad = _round_up(max(B, _ROW_ALIGN), _ROW_ALIGN)
    TB = max(_ROW_ALIGN, min(tb, B_pad))
    grid_n = pl.cdiv(B_pad, TB)
    if grid_n == 1 and B_pad >= 2048:
        grid_n = 2
    TB = _round_up(pl.cdiv(B_pad, grid_n), _ROW_ALIGN)
    B_full = TB * grid_n
    if B_full != B:
        x = jnp.pad(x, ((0, B_full - B), (0, 0)))

    in_specs = [pl.BlockSpec((TB, n_in), lambda i: (i, 0))]
    # Weights / biases: constant index_map -> fetched once, VMEM-resident.
    # TODO(synk): pipeline_mode=pl.Buffered(1) on these constant blocks would
    # halve their (already tiny) resident footprint on v7x; negligible here.
    for p in prepared_params:
        in_specs.append(pl.BlockSpec(p.shape, lambda i: (0, 0)))
    # Narrow n_out-wide output: contiguous HBM writeback, no padded slab + slice.
    out_spec = pl.BlockSpec((TB, n_out), lambda i: (i, 0))

    flops = 0
    bytes_accessed = x.size * x.dtype.itemsize + B_full * n_out * 4
    for j in range(n_linear):
        w = prepared_params[2 * j]
        b = prepared_params[2 * j + 1]
        flops += 2 * B_full * w.shape[0] * w.shape[1]
        bytes_accessed += w.size * w.dtype.itemsize + b.size * b.dtype.itemsize

    return pl.pallas_call(
        _make_mlp_kernel(n_linear),
        out_shape=jax.ShapeDtypeStruct((B_full, n_out), jnp.float32),
        grid=(grid_n,),
        in_specs=in_specs,
        out_specs=out_spec,
        compiler_params=pltpu.CompilerParams(
            dimension_semantics=("parallel",),
            # Footprint at TB=2048 / hidden<=1024 is a few MiB; 32 MiB leaves
            # double-buffer headroom and stays inside v7x's 64 MiB physical VMEM.
            vmem_limit_bytes=32 * 1024 * 1024,
        ),
        cost_estimate=pl.CostEstimate(
            flops=int(flops), transcendentals=0, bytes_accessed=int(bytes_accessed)
        ),
    )(x, *prepared_params)


# ---------------------------------------------------------------------------
# WindowLinearLayer forward
# ---------------------------------------------------------------------------
def window_linear_forward(static_data, temporal_data, params, window_size, *, block_rows=2048):
    """Pallas equivalent of WindowLinearLayer.forward.

    static_data:   (B, n_static_units_in)      float
    temporal_data: (B, seq_len, n_temporal)    float
    """
    static_data = jnp.asarray(static_data, jnp.float32)
    temporal_data = jnp.asarray(temporal_data, jnp.float32)
    B, seq_len, n_feats = temporal_data.shape
    n_static = static_data.shape[1]

    if n_static > 0 and static_data.shape[0] != B:
        raise ValueError("Length mismatch between static and temporal data")

    # Last `window_size` timesteps, flattened row-major over (time, feat) --
    # identical to torch's .reshape(batch_size, n_feats * window_size).
    temporal_win = temporal_data[:, seq_len - window_size:, :].reshape(
        B, n_feats * window_size
    )

    # Single packed input -> ONE layer-0 GEMM over K = n_static + window*n_feats.
    if n_static > 0:
        x = jnp.concatenate([static_data, temporal_win], axis=1)
    else:
        x = temporal_win
    x = x.astype(jnp.bfloat16)   # bf16 operands, f32 accumulation in-kernel

    prepared = _pad_and_cast_params(params["weights"], params["biases"])
    out = _fused_mlp_forward(x, prepared, tb=block_rows)
    return out[:B]   # drop batch padding rows (last dim already exact n_units_out)


# ---------------------------------------------------------------------------
# Deterministic parameter init (mimics torch.nn.Linear default init shapes)
# ---------------------------------------------------------------------------
def init_window_linear_params(
    key,
    n_static_units_in,
    n_temporal_units_in,
    window_size,
    n_units_out,
    n_units_hidden=100,
    n_layers=1,
):
    n_units_in = n_static_units_in + n_temporal_units_in * window_size
    dims = [n_units_in] + [n_units_hidden] * n_layers + [n_units_out]

    weights, biases = [], []
    for i in range(len(dims) - 1):
        fan_in, fan_out = dims[i], dims[i + 1]
        key, kw, kb = jax.random.split(key, 3)
        bound = 1.0 / jnp.sqrt(jnp.float32(fan_in))
        w = jax.random.uniform(kw, (fan_in, fan_out), jnp.float32, -bound, bound)
        b = jax.random.uniform(kb, (1, fan_out), jnp.float32, -bound, bound)
        weights.append(w)
        biases.append(b)
    return {"weights": weights, "biases": biases}


# ---------------------------------------------------------------------------
if __name__ == "__main__":
    # TODO(synk): dropout (p=0 by default, train-time only) is not implemented;
    # this is the inference forward path.
    batch = 8
    n_static = 4
    n_temporal = 6
    seq_len = 8
    window_size = 4
    n_units_hidden = 32
    n_units_out = 8
    n_layers = 1  # module default

    key = jax.random.PRNGKey(0)
    k_static, k_temporal, k_params = jax.random.split(key, 3)

    static_data = jax.random.normal(k_static, (batch, n_static), jnp.float32)
    temporal_data = jax.random.normal(
        k_temporal, (batch, seq_len, n_temporal), jnp.float32
    )

    params = init_window_linear_params(
        k_params,
        n_static_units_in=n_static,
        n_temporal_units_in=n_temporal,
        window_size=window_size,
        n_units_out=n_units_out,
        n_units_hidden=n_units_hidden,
        n_layers=n_layers,
    )

    fwd = jax.jit(
        functools.partial(window_linear_forward, window_size=window_size)
    )
    out = fwd(static_data, temporal_data, params)
    jax.block_until_ready(out)
    assert out.shape == (batch, n_units_out)

    # References (original concat formulation).
    tb_ = temporal_data[:, seq_len - window_size:, :].reshape(
        batch, n_temporal * window_size
    )
    x = jnp.concatenate([static_data, tb_], axis=1)

    h32 = x
    hb = x.astype(jnp.bfloat16)
    n_lin = len(params["weights"])
    for i, (w, b) in enumerate(zip(params["weights"], params["biases"])):
        h32 = h32 @ w + b
        hb = jnp.dot(hb, w.astype(jnp.bfloat16),
                     preferred_element_type=jnp.float32) + b
        if i < n_lin - 1:
            h32 = jnp.maximum(h32, 0.0)
            hb = jnp.maximum(hb, 0.0).astype(jnp.bfloat16)

    # Tight match to a reference using the same bf16-operand / f32-accum math...
    err_b = float(jnp.max(jnp.abs(out - hb)))
    assert err_b < 5e-3, f"bf16-matched reference mismatch: {err_b}"
    # ...and a looser sanity check against the full-f32 reference.
    err_32 = float(jnp.max(jnp.abs(out - h32)))
    assert err_32 < 5e-2, f"f32 reference mismatch: {err_32}"

    print("KERNEL_OK")
</pallas_src>

<mosaic_0001>
module attributes {stable_mosaic.version = 11 : i64} {
  func.func @kernel(%arg0: i32, %arg1: memref<16x28xbf16, #tpu.memory_space<vmem>>, %arg2: memref<28x128xbf16, #tpu.memory_space<vmem>>, %arg3: memref<1x128xf32, #tpu.memory_space<vmem>>, %arg4: memref<128x8xbf16, #tpu.memory_space<vmem>>, %arg5: memref<1x8xf32, #tpu.memory_space<vmem>>, %arg6: memref<16x8xf32, #tpu.memory_space<vmem>>) attributes {dimension_semantics = [#tpu.dimension_semantics<parallel>], iteration_bounds = array<i64: 1>, scalar_prefetch = 0 : i64, scratch_operands = 0 : i64, tpu.core_type = #tpu.core_type<tc>, window_params = [{transform_indices = @transform_0, window_bounds = array<i64: 16, 28>}, {pipeline_mode = #tpu.pipeline_mode<synchronous>, transform_indices = @transform_1, window_bounds = array<i64: 28, 128>}, {pipeline_mode = #tpu.pipeline_mode<synchronous>, transform_indices = @transform_2, window_bounds = array<i64: 1, 128>}, {pipeline_mode = #tpu.pipeline_mode<synchronous>, transform_indices = @transform_3, window_bounds = array<i64: 128, 8>}, {pipeline_mode = #tpu.pipeline_mode<synchronous>, transform_indices = @transform_4, window_bounds = array<i64: 1, 8>}, {transform_indices = @transform_5, window_bounds = array<i64: 16, 8>}]} {
    %c0 = arith.constant 0 : index
    %c0_0 = arith.constant 0 : index
    %0 = vector.load %arg1[%c0, %c0_0] : memref<16x28xbf16, #tpu.memory_space<vmem>>, vector<16x28xbf16>
    %c0_1 = arith.constant 0 : index
    %c0_2 = arith.constant 0 : index
    %1 = vector.load %arg2[%c0_1, %c0_2] : memref<28x128xbf16, #tpu.memory_space<vmem>>, vector<28x128xbf16>
    %c0_3 = arith.constant 0 : index
    %c0_4 = arith.constant 0 : index
    %2 = vector.load %arg3[%c0_3, %c0_4] : memref<1x128xf32, #tpu.memory_space<vmem>>, vector<1x128xf32>
    %cst = arith.constant dense<0.000000e+00> : vector<16x128xf32>
    %3 = tpu.matmul %0, %1, %cst {dimension_numbers = #tpu.dot_dimension_numbers<[1], [0], [0], [1], [0, 0, 1, 1], [], []>} : vector<16x28xbf16>, vector<28x128xbf16>, vector<16x128xf32> -> vector<16x128xf32>
    %4 = vector.broadcast %2 : vector<1x128xf32> to vector<16x128xf32>
    %5 = arith.addf %3, %4 : vector<16x128xf32>
    %cst_5 = arith.constant 0.000000e+00 : f32
    %6 = vector.broadcast %cst_5 : f32 to vector<16x128xf32>
    %7 = arith.maximumf %5, %6 : vector<16x128xf32>
    %8 = arith.truncf %7 : vector<16x128xf32> to vector<16x128xbf16>
    %c0_6 = arith.constant 0 : index
    %c0_7 = arith.constant 0 : index
    %9 = vector.load %arg4[%c0_6, %c0_7] : memref<128x8xbf16, #tpu.memory_space<vmem>>, vector<128x8xbf16>
    %c0_8 = arith.constant 0 : index
    %c0_9 = arith.constant 0 : index
    %10 = vector.load %arg5[%c0_8, %c0_9] : memref<1x8xf32, #tpu.memory_space<vmem>>, vector<1x8xf32>
    %cst_10 = arith.constant dense<0.000000e+00> : vector<16x8xf32>
    %11 = tpu.matmul %8, %9, %cst_10 {dimension_numbers = #tpu.dot_dimension_numbers<[1], [0], [0], [1], [0, 0, 1, 1], [], []>} : vector<16x128xbf16>, vector<128x8xbf16>, vector<16x8xf32> -> vector<16x8xf32>
    %12 = vector.broadcast %10 : vector<1x8xf32> to vector<16x8xf32>
    %13 = arith.addf %11, %12 : vector<16x8xf32>
    %c0_11 = arith.constant 0 : index
    %c0_12 = arith.constant 0 : index
    %14 = vector.load %arg6[%c0_11, %c0_12] : memref<16x8xf32, #tpu.memory_space<vmem>>, vector<16x8xf32>
    tpu.vector_store %arg6[%c0_11, %c0_12], %13 {strides = array<i32>} : memref<16x8xf32, #tpu.memory_space<vmem>>, vector<16x8xf32>,
    return
  }
  func.func @transform_0(%arg0: i32) -> (i32, i32) {
    %c0_i32 = arith.constant 0 : i32
    %c0_i32_0 = arith.constant 0 : i32
    return %arg0, %c0_i32 : i32, i32
  }
  func.func @transform_1(%arg0: i32) -> (i32, i32) {
    %c0_i32 = arith.constant 0 : i32
    %c0_i32_0 = arith.constant 0 : i32
    %c0_i32_1 = arith.constant 0 : i32
    return %c0_i32, %c0_i32_0 : i32, i32
  }
  func.func @transform_2(%arg0: i32) -> (i32, i32) {
    %c0_i32 = arith.constant 0 : i32
    %c0_i32_0 = arith.constant 0 : i32
    %c0_i32_1 = arith.constant 0 : i32
    return %c0_i32, %c0_i32_0 : i32, i32
  }
  func.func @transform_3(%arg0: i32) -> (i32, i32) {
    %c0_i32 = arith.constant 0 : i32
    %c0_i32_0 = arith.constant 0 : i32
    %c0_i32_1 = arith.constant 0 : i32
    return %c0_i32, %c0_i32_0 : i32, i32
  }
  func.func @transform_4(%arg0: i32) -> (i32, i32) {
    %c0_i32 = arith.constant 0 : i32
    %c0_i32_0 = arith.constant 0 : i32
    %c0_i32_1 = arith.constant 0 : i32
    return %c0_i32, %c0_i32_0 : i32, i32
  }
  func.func @transform_5(%arg0: i32) -> (i32, i32) {
    %c0_i32 = arith.constant 0 : i32
    %c0_i32_0 = arith.constant 0 : i32
    return %arg0, %c0_i32 : i32, i32
  }
}

</mosaic_0001>

<llo_original>
// kernel: window_linear_forward.1
$region0: #{window_linear_forward.1}
  #allocation0 [shape = 'u32[]', space=smem, size = 0x4, offset = 0x4, fixed_abs, tag = 'smem constant byte address 0x4 - core index']
  #allocation1 [shape = 'u32[144,128]{1,0:T(1,128)}', space=vmem, size = 0x12000, scoped, tag = 'internal scratch']
  %s0 = inlined_call_operand.vmem [shape: bf16[16,28], index: 0, kind: input, shape index: {}]
  %s1 = inlined_call_operand.vmem [shape: bf16[28,128], index: 1, kind: input, shape index: {}]
  %s2 = inlined_call_operand.vmem [shape: f32[1,128], index: 2, kind: input, shape index: {}]
  %s3 = inlined_call_operand.vmem [shape: bf16[128,8], index: 3, kind: input, shape index: {}]
  %s4 = inlined_call_operand.vmem [shape: f32[1,8], index: 4, kind: input, shape index: {}]
  %s5 = inlined_call_operand.vmem [shape: f32[16,8], index: 5, kind: output, shape index: {}]
  %s6 = sld [smem:[#allocation0]]
  $region30: #{window_linear_forward.1} parent=0
    _
  %s8 = ssub.s32 1, %s6
  %s9 = scalar_select 0, %s8, %s6
  // Predicated region
  $region2: #{window_linear_forward.1} parent=0 // pred_check
    _
  $region3: #{window_linear_forward.1} parent=0 // pred_check_branch
    %11 = sbr.rel (0) target = $region5
  $region4: #{window_linear_forward.1} parent=0 // pred_region
    _
  $region5: #{window_linear_forward.1} parent=0 // pred_fallthru
    _
  // Predicated region
  $region6: #{window_linear_forward.1} parent=0 // pred_check
    _
  $region7: #{window_linear_forward.1} parent=0 // pred_check_branch
    %13 = sbr.rel (0) target = $region9
  $region8: #{window_linear_forward.1} parent=0 // pred_region
    _
  $region9: #{window_linear_forward.1} parent=0 // pred_fallthru
    _
  // Predicated region
  $region10: #{window_linear_forward.1} parent=0 // pred_check
    _
  $region11: #{window_linear_forward.1} parent=0 // pred_check_branch
    %15 = sbr.rel (0) target = $region13
  $region12: #{window_linear_forward.1} parent=0 // pred_region
    _
  $region13: #{window_linear_forward.1} parent=0 // pred_fallthru
    _
  // Predicated region
  $region14: #{window_linear_forward.1} parent=0 // pred_check
    _
  $region15: #{window_linear_forward.1} parent=0 // pred_check_branch
    %17 = sbr.rel (0) target = $region17
  $region16: #{window_linear_forward.1} parent=0 // pred_region
    _
  $region17: #{window_linear_forward.1} parent=0 // pred_fallthru
    _
  // Predicated region
  $region18: #{window_linear_forward.1} parent=0 // pred_check
    _
  $region19: #{window_linear_forward.1} parent=0 // pred_check_branch
    %19 = sbr.rel (0) target = $region21
  $region20: #{window_linear_forward.1} parent=0 // pred_region
    _
  $region21: #{window_linear_forward.1} parent=0 // pred_fallthru
    _
  %v21 = vld [vmem:[%s0] sm:$0xf]
  %v22 = vld [vmem:[%s0 + $0x4] sm:$0xf]
  %v23 = vld [vmem:[%s1] sm:$0xf]
  %v24 = vld [vmem:[%s1 + $0x4] sm:$0xf]
  %v25 = vld [vmem:[%s1 + $0x8] sm:$0xf]
  %v26 = vld [vmem:[%s1 + $0xc] sm:$0x3]
  %v27 = vld [vmem:[%s2] sm:$0x1]
  %v29 = vlaneseq
  %v30 = vshrl.u32 %v29, 7
  %v31 = vsub.s32 0, %v30
  %v32 = vrot.slane %v27, %v31
  %v36 = vunpack.c.l.b16 %v21
  %v37 = vunpack.c.l.b16 %v22
  %v38 = vpack.c.b16 %v37, %v36
  %v43 = vunpack.c.l.b16 %v23
  %v44 = vunpack.c.l.b16 %v24
  %v45 = vunpack.c.l.b16 %v25
  %v46 = vunpack.c.l.b16 %v26
  %v47 = vpack.c.b16 %v44, %v43
  %v48 = vpack.c.b16 %v46, %v45
  %vm50 = vcmask 228352
  %v52 = vsel %vm50, %v38, 0
  %vm54 = vcmask 1045504
  %v56 = vsel %vm54, %v48, 0
  %58 = vmatprep.subr.bf16.mxu0 0
  %59 = vmatpush1.bf16.msra.mxu0 %v47
  %60 = vmatprep.subr.bf16.mxu0 0
  %61 = vmatpush1.bf16.msra.mxu0 %v56
  %62 = vmatprep.subr.bf16.mxu0 0
  %63 = vmatpush1.bf16.msra.mxu0 0
  %64 = vmatprep.subr.bf16.mxu0 0
  %65 = vmatpush1.bf16.msra.mxu0 0
  %66 = vmatprep.subr.bf16.mxu0 0
  %67 = vmatpush1.bf16.msra.mxu0 0
  %68 = vmatprep.subr.bf16.mxu0 0
  %69 = vmatpush1.bf16.msra.mxu0 0
  %70 = vmatprep.subr.bf16.mxu0 0
  %71 = vmatpush1.bf16.msra.mxu0 0
  %72 = vmatprep.subr.bf16.mxu0 0
  %73 = vmatpush1.bf16.msra.mxu0 0
  %74 = vmatprep.subr.bf16.mxu0 0
  %75 = vmatpush1.bf16.msra.mxu0 0
  %76 = vmatprep.subr.bf16.mxu0 0
  %77 = vmatpush1.bf16.msra.mxu0 0
  %78 = vmatprep.subr.bf16.mxu0 0
  %79 = vmatpush1.bf16.msra.mxu0 0
  %80 = vmatprep.subr.bf16.mxu0 0
  %81 = vmatpush1.bf16.msra.mxu0 0
  %82 = vmatprep.subr.bf16.mxu0 0
  %83 = vmatpush1.bf16.msra.mxu0 0
  %84 = vmatprep.subr.bf16.mxu0 0
  %85 = vmatpush1.bf16.msra.mxu0 0
  %86 = vmatprep.subr.bf16.mxu0 0
  %87 = vmatpush1.bf16.msra.mxu0 0
  %88 = vmatprep.subr.bf16.mxu0 0
  %89 = vmatpush1.bf16.msra.mxu0 0
  %90 = vmatprep.mubr.bf16.mxu0 0
  %91 = vmatmul.mubr.bf16.gmra.mrb[0].mxu0 %v52
  %v92 = vpop.f32.mrb[0].mxu0
  %v93 = vadd.f32 %v32, %v92
  %v94 = vpop.f32.mrb[0].mxu0
  %v95 = vpop.f32.mrb[0].mxu0
  %v96 = vadd.f32 %v32, %v95
  %v97 = vpop.f32.mrb[0].mxu0
  %98 = vdwg.mxu0
  %v99 = vmax.f32 %v93, 0.0
  %v100 = vmax.f32 %v96, 0.0
  %v101 = vpack.c.bf16 %v100, %v99
  %v102 = vld [vmem:[%s3] sm:$0xf]
  %v103 = vld [vmem:[%s3 + $0x4] sm:$0xf]
  %v104 = vld [vmem:[%s3 + $0x8] sm:$0xf]
  %v105 = vld [vmem:[%s3 + $0xc] sm:$0xf]
  %v106 = vld [vmem:[%s3 + $0x10] sm:$0xf]
  %v107 = vld [vmem:[%s3 + $0x14] sm:$0xf]
  %v108 = vld [vmem:[%s3 + $0x18] sm:$0xf]
  %v109 = vld [vmem:[%s3 + $0x1c] sm:$0xf]
  %v110 = vld [vmem:[%s3 + $0x20] sm:$0xf]
  %v111 = vld [vmem:[%s3 + $0x24] sm:$0xf]
  %v112 = vld [vmem:[%s3 + $0x28] sm:$0xf]
  %v113 = vld [vmem:[%s3 + $0x2c] sm:$0xf]
  %v114 = vld [vmem:[%s3 + $0x30] sm:$0xf]
  %v115 = vld [vmem:[%s3 + $0x34] sm:$0xf]
  %v116 = vld [vmem:[%s3 + $0x38] sm:$0xf]
  %v117 = vld [vmem:[%s3 + $0x3c] sm:$0xf]
  %v118 = vld [vmem:[%s4] sm:$0x1]
  %v120 = vlaneseq
  %v121 = vshrl.u32 %v120, 7
  %v122 = vsub.s32 0, %v121
  %v123 = vrot.slane %v118, %v122
  %v141 = vunpack.c.l.b16 %v102
  %v142 = vunpack.c.l.b16 %v103
  %v143 = vunpack.c.l.b16 %v104
  %v144 = vunpack.c.l.b16 %v105
  %v145 = vunpack.c.l.b16 %v106
  %v146 = vunpack.c.l.b16 %v107
  %v147 = vunpack.c.l.b16 %v108
  %v148 = vunpack.c.l.b16 %v109
  %v149 = vunpack.c.l.b16 %v110
  %v150 = vunpack.c.l.b16 %v111
  %v151 = vunpack.c.l.b16 %v112
  %v152 = vunpack.c.l.b16 %v113
  %v153 = vunpack.c.l.b16 %v114
  %v154 = vunpack.c.l.b16 %v115
  %v155 = vunpack.c.l.b16 %v116
  %v156 = vunpack.c.l.b16 %v117
  %v157 = vpack.c.b16 %v142, %v141
  %v158 = vpack.c.b16 %v144, %v143
  %v159 = vpack.c.b16 %v146, %v145
  %v160 = vpack.c.b16 %v148, %v147
  %v161 = vpack.c.b16 %v150, %v149
  %v162 = vpack.c.b16 %v152, %v151
  %v163 = vpack.c.b16 %v154, %v153
  %v164 = vpack.c.b16 %v156, %v155
  %173 = vmatprep.subr.bf16.mxu0 0
  %174 = vmatpush1.bf16.msra.mxu0 %v157
  %175 = vmatprep.subr.bf16.mxu0 0
  %176 = vmatpush1.bf16.msra.mxu0 %v158
  %177 = vmatprep.subr.bf16.mxu0 0
  %178 = vmatpush1.bf16.msra.mxu0 %v159
  %179 = vmatprep.subr.bf16.mxu0 0
  %180 = vmatpush1.bf16.msra.mxu0 %v160
  %181 = vmatprep.subr.bf16.mxu0 0
  %182 = vmatpush1.bf16.msra.mxu0 %v161
  %183 = vmatprep.subr.bf16.mxu0 0
  %184 = vmatpush1.bf16.msra.mxu0 %v162
  %185 = vmatprep.subr.bf16.mxu0 0
  %186 = vmatpush1.bf16.msra.mxu0 %v163
  %187 = vmatprep.subr.bf16.mxu0 0
  %188 = vmatpush1.bf16.msra.mxu0 %v164
  %189 = vmatprep.subr.bf16.mxu0 0
  %190 = vmatpush1.bf16.msra.mxu0 0
  %191 = vmatprep.subr.bf16.mxu0 0
  %192 = vmatpush1.bf16.msra.mxu0 0
  %193 = vmatprep.subr.bf16.mxu0 0
  %194 = vmatpush1.bf16.msra.mxu0 0
  %195 = vmatprep.subr.bf16.mxu0 0
  %196 = vmatpush1.bf16.msra.mxu0 0
  %197 = vmatprep.subr.bf16.mxu0 0
  %198 = vmatpush1.bf16.msra.mxu0 0
  %199 = vmatprep.subr.bf16.mxu0 0
  %200 = vmatpush1.bf16.msra.mxu0 0
  %201 = vmatprep.subr.bf16.mxu0 0
  %202 = vmatpush1.bf16.msra.mxu0 0
  %203 = vmatprep.subr.bf16.mxu0 0
  %204 = vmatpush1.bf16.msra.mxu0 0
  %205 = vmatprep.mubr.bf16.mxu0 0
  %206 = vmatmul.mubr.bf16.gmra.mrb[0].mxu0 %v101
  %v207 = vpop.f32.mrb[0].mxu0
  %v208 = vadd.f32 %v123, %v207
  %v209 = vpop.f32.mrb[0].mxu0
  %v210 = vpop.f32.mrb[0].mxu0
  %v211 = vadd.f32 %v123, %v210
  %v212 = vpop.f32.mrb[0].mxu0
  %213 = vdwg.mxu0
  %vm214 = vcmask 64512
  %215 = vst.msk [vmem:[%s5] sm:$0xff] %vm214, %v208
  %216 = vst.msk [vmem:[%s5 + $0x8] sm:$0xff] %vm214, %v211
  // Predicated region
  $region22: #{window_linear_forward.1} parent=0 // pred_check
    _
  $region23: #{window_linear_forward.1} parent=0 // pred_check_branch
    %218 = sbr.rel (0) target = $region25
  $region24: #{window_linear_forward.1} parent=0 // pred_region
    _
  $region25: #{window_linear_forward.1} parent=0 // pred_fallthru
    _
  // Predicated region
  $region26: #{window_linear_forward.1} parent=0 // pred_check
    _
  $region27: #{window_linear_forward.1} parent=0 // pred_check_branch
    %220 = sbr.rel (0) target = $region29
  $region28: #{window_linear_forward.1} parent=0 // pred_region
    _
  $region29: #{window_linear_forward.1} parent=0 // pred_fallthru
    _

</llo_original>
